<compile_context>
chip_gen: v5e
topology: v5e:2x2
jax: 0.10.0
libtpu: 0.0.40
codegen_flags: <defaults>
</compile_context>

<pallas_src>
import jax
import jax.numpy as jnp
from jax.experimental import pallas as pl
from jax.experimental.pallas import tpu as pltpu


def _round_up(x: int, m: int) -> int:
    return ((x + m - 1) // m) * m


def _fused_multitask_kernel(x_ref, w1_ref, b1_ref, w2_ref, b2_ref, o_ref):
    """o = relu(x @ W1_cat + b1) @ W2_blockdiag + b2  for all heads at once.

    x : (TM, d) f32   w1: (d, Hp) bf16   b1: (1, Hp) f32
    w2: (Hp, Ot) bf16 b2: (1, Ot) f32    o : (TM, Ot) f32
    """
    x = x_ref[...].astype(w1_ref.dtype)                    # f32 -> bf16 in-kernel
    h = jnp.dot(x, w1_ref[...], preferred_element_type=jnp.float32)
    h = jnp.maximum(h + b1_ref[...], 0.0)                  # f32 epilogue (v5e-safe)
    y = jnp.dot(h.astype(w2_ref.dtype), w2_ref[...],
                preferred_element_type=jnp.float32)
    o_ref[...] = (y + b2_ref[...]).astype(o_ref.dtype)


def fused_multitask_forward(x2d, w1c, b1c, w2bd, b2c, *, tile_rows=4096):
    """x2d: (N, d) f32 -> (N, out_total) f32, all heads fused, row-tiled grid."""
    n, d = x2d.shape
    hp = w1c.shape[1]
    ot = w2bd.shape[1]

    # Keep >=4 grid steps when N allows (v7x: feed both TensorCores) but cap the
    # tile so per-step VMEM stays tiny; tm multiple of 8 satisfies the sublane rule.
    tm = min(tile_rows, max(8, _round_up(pl.cdiv(n, 4), 8)))
    grid = (pl.cdiv(n, tm),)                                # no jnp.pad; tail block masked

    return pl.pallas_call(
        _fused_multitask_kernel,
        out_shape=jax.ShapeDtypeStruct((n, ot), jnp.float32),
        grid=grid,
        in_specs=[
            pl.BlockSpec((tm, d), lambda i: (i, 0)),        # x: row-tiled (d == full dim)
            pl.BlockSpec((d, hp), lambda i: (0, 0)),        # W1_cat: VMEM-resident
            pl.BlockSpec((1, hp), lambda i: (0, 0)),        # b1
            pl.BlockSpec((hp, ot), lambda i: (0, 0)),       # W2_blockdiag
            pl.BlockSpec((1, ot), lambda i: (0, 0)),        # b2
        ],
        out_specs=pl.BlockSpec((tm, ot), lambda i: (i, 0)), # real width: 4.3x fewer bytes
        compiler_params=pltpu.CompilerParams(
            dimension_semantics=("parallel",),              # shard rows across TCs (v7x)
            vmem_limit_bytes=32 * 1024 * 1024,              # lift v5e's 16 MiB scoped default
        ),
    )(x2d, w1c, b1c, w2bd, b2c)


class MultiTaskPallas:
    """JAX/Pallas equivalent of the PyTorch MultiTask module (all heads fused)."""

    def __init__(self, prefix_out_dims, d_model=32, key=None):
        self.prefix_list_target = list(prefix_out_dims.keys())
        self.d_model = d_model
        self.params = {}
        if key is None:
            key = jax.random.PRNGKey(0)

        # Per-head parameters (kept in f32 for the reference path).
        for prefix in self.prefix_list_target:
            out_dim = prefix_out_dims[prefix]
            key, k1, k2, k3, k4 = jax.random.split(key, 5)
            scale = 1.0 / jnp.sqrt(d_model)
            self.params[prefix] = {
                "w1": jax.random.uniform(k1, (d_model, d_model), jnp.float32, -scale, scale),
                "b1": jax.random.uniform(k2, (1, d_model), jnp.float32, -scale, scale),
                "w2": jax.random.uniform(k3, (d_model, out_dim), jnp.float32, -scale, scale),
                "b2": jax.random.uniform(k4, (1, out_dim), jnp.float32, -scale, scale),
            }

        # ---- Build fused weights (done once, outside the kernel) ----
        h = len(self.prefix_list_target)
        d = d_model
        self.hid_pad = _round_up(h * d, 128)                # lane-dense hidden width (VMEM only)

        self.out_offsets = {}
        off = 0
        for p in self.prefix_list_target:
            od = prefix_out_dims[p]
            self.out_offsets[p] = (off, od)
            off += od
        self.out_total = off                                 # output stored at real width

        w1c = jnp.zeros((d, self.hid_pad), jnp.float32)
        b1c = jnp.zeros((1, self.hid_pad), jnp.float32)
        w2bd = jnp.zeros((self.hid_pad, self.out_total), jnp.float32)
        b2c = jnp.zeros((1, self.out_total), jnp.float32)
        for i, p in enumerate(self.prefix_list_target):
            pr = self.params[p]
            r0 = i * d
            c0, od = self.out_offsets[p]
            w1c = w1c.at[:, r0:r0 + d].set(pr["w1"])
            b1c = b1c.at[:, r0:r0 + d].set(pr["b1"])
            w2bd = w2bd.at[r0:r0 + d, c0:c0 + od].set(pr["w2"])
            b2c = b2c.at[:, c0:c0 + od].set(pr["b2"])

        # MXU operands in bf16; biases stay f32 (f32 epilogue inside the kernel).
        self.w1c = w1c.astype(jnp.bfloat16)
        self.b1c = b1c
        self.w2bd = w2bd.astype(jnp.bfloat16)
        self.b2c = b2c

        out_slices = tuple((p,) + self.out_offsets[p] for p in self.prefix_list_target)
        out_total = self.out_total

        @jax.jit
        def _forward(elm_agg_emb, w1c_, b1c_, w2bd_, b2c_):
            seq, batch, dd = elm_agg_emb.shape
            # No pre-kernel transpose or cast: row-wise MLP is row-order independent
            # and the f32->bf16 cast happens inside the kernel.
            x = elm_agg_emb.reshape(seq * batch, dd)
            y = fused_multitask_forward(x, w1c_, b1c_, w2bd_, b2c_)
            y = y.reshape(seq, batch, out_total)
            y = jnp.transpose(y, (1, 0, 2))                  # small output transpose
            return {p: y[:, :, o:o + od] for (p, o, od) in out_slices}

        self._forward = _forward

    def __call__(self, elm_agg_emb):
        assert elm_agg_emb.shape[-1] == self.d_model
        return self._forward(elm_agg_emb, self.w1c, self.b1c, self.w2bd, self.b2c)


def _reference(model, elm_agg_emb):
    """Pure-JAX f32 reference of the same forward (PyTorch semantics)."""
    x = jnp.transpose(elm_agg_emb, (1, 0, 2)).astype(jnp.float32)
    outs = {}
    for prefix in model.prefix_list_target:
        p = model.params[prefix]
        h = jnp.maximum(x @ p["w1"] + p["b1"][0], 0.0)
        outs[prefix] = h @ p["w2"] + p["b2"][0]
    return outs


if __name__ == "__main__":
    key = jax.random.PRNGKey(0)
    seq, batch, d_model = 8, 2, 32
    prefix_out_dims = {"text_font": 16, "text_font_size": 10, "text_align_type": 4}

    k_in, k_params = jax.random.split(key)
    elm_agg_emb = jax.random.normal(k_in, (seq, batch, d_model), jnp.float32)

    model = MultiTaskPallas(prefix_out_dims, d_model=d_model, key=k_params)

    outputs = model(elm_agg_emb)
    outputs = jax.tree_util.tree_map(jax.block_until_ready, outputs)

    ref = _reference(model, elm_agg_emb)
    for prefix in prefix_out_dims:
        assert outputs[prefix].shape == (batch, seq, prefix_out_dims[prefix]), (
            prefix, outputs[prefix].shape)
        err = float(jnp.max(jnp.abs(outputs[prefix] - ref[prefix])))
        # bf16 MXU operands with f32 accumulation -> loosened tolerance.
        assert err < 5e-2, (prefix, err)

    print("KERNEL_OK")
</pallas_src>

<mosaic_0001>
module attributes {stable_mosaic.version = 11 : i64} {
  func.func @_fused_multitask_kernel(%arg0: i32, %arg1: memref<8x32xf32, #tpu.memory_space<vmem>>, %arg2: memref<32x128xbf16, #tpu.memory_space<vmem>>, %arg3: memref<1x128xf32, #tpu.memory_space<vmem>>, %arg4: memref<128x30xbf16, #tpu.memory_space<vmem>>, %arg5: memref<1x30xf32, #tpu.memory_space<vmem>>, %arg6: memref<8x30xf32, #tpu.memory_space<vmem>>) attributes {dimension_semantics = [#tpu.dimension_semantics<parallel>], iteration_bounds = array<i64: 2>, scalar_prefetch = 0 : i64, scratch_operands = 0 : i64, tpu.core_type = #tpu.core_type<tc>, window_params = [{transform_indices = @transform_0, window_bounds = array<i64: 8, 32>}, {pipeline_mode = #tpu.pipeline_mode<synchronous>, transform_indices = @transform_1, window_bounds = array<i64: 32, 128>}, {pipeline_mode = #tpu.pipeline_mode<synchronous>, transform_indices = @transform_2, window_bounds = array<i64: 1, 128>}, {pipeline_mode = #tpu.pipeline_mode<synchronous>, transform_indices = @transform_3, window_bounds = array<i64: 128, 30>}, {pipeline_mode = #tpu.pipeline_mode<synchronous>, transform_indices = @transform_4, window_bounds = array<i64: 1, 30>}, {transform_indices = @transform_5, window_bounds = array<i64: 8, 30>}]} {
    %c0 = arith.constant 0 : index
    %c0_0 = arith.constant 0 : index
    %0 = vector.load %arg1[%c0, %c0_0] : memref<8x32xf32, #tpu.memory_space<vmem>>, vector<8x32xf32>
    %1 = arith.truncf %0 : vector<8x32xf32> to vector<8x32xbf16>
    %c0_1 = arith.constant 0 : index
    %c0_2 = arith.constant 0 : index
    %2 = vector.load %arg2[%c0_1, %c0_2] : memref<32x128xbf16, #tpu.memory_space<vmem>>, vector<32x128xbf16>
    %cst = arith.constant dense<0.000000e+00> : vector<8x128xf32>
    %3 = tpu.matmul %1, %2, %cst {dimension_numbers = #tpu.dot_dimension_numbers<[1], [0], [0], [1], [0, 0, 1, 1], [], []>} : vector<8x32xbf16>, vector<32x128xbf16>, vector<8x128xf32> -> vector<8x128xf32>
    %c0_3 = arith.constant 0 : index
    %c0_4 = arith.constant 0 : index
    %4 = vector.load %arg3[%c0_3, %c0_4] : memref<1x128xf32, #tpu.memory_space<vmem>>, vector<1x128xf32>
    %5 = vector.broadcast %4 : vector<1x128xf32> to vector<8x128xf32>
    %6 = arith.addf %3, %5 : vector<8x128xf32>
    %cst_5 = arith.constant 0.000000e+00 : f32
    %7 = vector.broadcast %cst_5 : f32 to vector<8x128xf32>
    %8 = arith.maximumf %6, %7 : vector<8x128xf32>
    %9 = arith.truncf %8 : vector<8x128xf32> to vector<8x128xbf16>
    %c0_6 = arith.constant 0 : index
    %c0_7 = arith.constant 0 : index
    %10 = vector.load %arg4[%c0_6, %c0_7] : memref<128x30xbf16, #tpu.memory_space<vmem>>, vector<128x30xbf16>
    %cst_8 = arith.constant dense<0.000000e+00> : vector<8x30xf32>
    %11 = tpu.matmul %9, %10, %cst_8 {dimension_numbers = #tpu.dot_dimension_numbers<[1], [0], [0], [1], [0, 0, 1, 1], [], []>} : vector<8x128xbf16>, vector<128x30xbf16>, vector<8x30xf32> -> vector<8x30xf32>
    %c0_9 = arith.constant 0 : index
    %c0_10 = arith.constant 0 : index
    %12 = vector.load %arg5[%c0_9, %c0_10] : memref<1x30xf32, #tpu.memory_space<vmem>>, vector<1x30xf32>
    %13 = vector.broadcast %12 : vector<1x30xf32> to vector<8x30xf32>
    %14 = arith.addf %11, %13 : vector<8x30xf32>
    %c0_11 = arith.constant 0 : index
    %c0_12 = arith.constant 0 : index
    %15 = vector.load %arg6[%c0_11, %c0_12] : memref<8x30xf32, #tpu.memory_space<vmem>>, vector<8x30xf32>
    tpu.vector_store %arg6[%c0_11, %c0_12], %14 {strides = array<i32>} : memref<8x30xf32, #tpu.memory_space<vmem>>, vector<8x30xf32>,
    return
  }
  func.func @transform_0(%arg0: i32) -> (i32, i32) {
    %c0_i32 = arith.constant 0 : i32
    %c0_i32_0 = arith.constant 0 : i32
    return %arg0, %c0_i32 : i32, i32
  }
  func.func @transform_1(%arg0: i32) -> (i32, i32) {
    %c0_i32 = arith.constant 0 : i32
    %c0_i32_0 = arith.constant 0 : i32
    %c0_i32_1 = arith.constant 0 : i32
    return %c0_i32, %c0_i32_0 : i32, i32
  }
  func.func @transform_2(%arg0: i32) -> (i32, i32) {
    %c0_i32 = arith.constant 0 : i32
    %c0_i32_0 = arith.constant 0 : i32
    %c0_i32_1 = arith.constant 0 : i32
    return %c0_i32, %c0_i32_0 : i32, i32
  }
  func.func @transform_3(%arg0: i32) -> (i32, i32) {
    %c0_i32 = arith.constant 0 : i32
    %c0_i32_0 = arith.constant 0 : i32
    %c0_i32_1 = arith.constant 0 : i32
    return %c0_i32, %c0_i32_0 : i32, i32
  }
  func.func @transform_4(%arg0: i32) -> (i32, i32) {
    %c0_i32 = arith.constant 0 : i32
    %c0_i32_0 = arith.constant 0 : i32
    %c0_i32_1 = arith.constant 0 : i32
    return %c0_i32, %c0_i32_0 : i32, i32
  }
  func.func @transform_5(%arg0: i32) -> (i32, i32) {
    %c0_i32 = arith.constant 0 : i32
    %c0_i32_0 = arith.constant 0 : i32
    return %arg0, %c0_i32 : i32, i32
  }
}

</mosaic_0001>

<llo_original>
// kernel: _forward.1
$region0: #{_forward.1}
  #allocation0 [shape = 'u32[]', space=smem, size = 0x4, offset = 0x4, fixed_abs, tag = 'smem constant byte address 0x4 - core index']
  #allocation1 [shape = 'u32[72,128]{1,0:T(1,128)}', space=vmem, size = 0x9000, scoped, tag = 'internal scratch']
  %s0 = inlined_call_operand.vmem [shape: f32[16,32], index: 0, kind: input, shape index: {}]
  %s1 = inlined_call_operand.vmem [shape: bf16[32,128], index: 1, kind: input, shape index: {}]
  %s2 = inlined_call_operand.vmem [shape: f32[1,128], index: 2, kind: input, shape index: {}]
  %s3 = inlined_call_operand.vmem [shape: bf16[128,30], index: 3, kind: input, shape index: {}]
  %s4 = inlined_call_operand.vmem [shape: f32[1,30], index: 4, kind: input, shape index: {}]
  %s5 = inlined_call_operand.vmem [shape: f32[16,30], index: 5, kind: output, shape index: {}]
  %s6 = sld [smem:[#allocation0]]
  $region53: #{_forward.1} parent=0
    _
  %s8 = ssub.s32 1, %s6
  %s9 = scalar_select 0, %s8, %s6
  loop: start=0, step=1, limit=4
  $region2: #{_forward.1} parent=0 // loop_pre_header
    _
  $region3: #{_forward.1} parent=0 // loop_header
    %s11 = sphi 0, %s15
    %p12 = scmp.ge.s32.totalorder %s11, 4
    %s21 = sphi 0, %s23
    %s24 = sphi 0, %s21
    %s25 = sphi 0, %s24
    %s41 = sphi 0, %s25
    %s45 = sphi 0, %s45
    %s47 = sphi 0, %s45
    %s48 = sphi 0, %s47
    %s62 = sphi 0, %s48
    %s66 = sphi 0, %s66
    %s68 = sphi 0, %s66
    %s69 = sphi 0, %s68
    %s83 = sphi 0, %s69
    %s87 = sphi 0, %s87
    %s89 = sphi 0, %s87
    %s90 = sphi 0, %s89
    %s104 = sphi 0, %s90
    %s108 = sphi 0, %s108
    %s110 = sphi 0, %s108
    %s111 = sphi 0, %s110
    %s125 = sphi 0, %s111
    %s131 = sphi 0, %s133
    %s134 = sphi 0, %s131
    %s135 = sphi 0, %s134
    %s151 = sphi 0, %s135
  $region4: #{_forward.1} parent=0 // loop_header_branch
    %14 = sbr.rel (%p12) target = $region8
  $region5: #{_forward.1} parent=0 // loop_body
    %s16 = ssub.s32 %s11, 1
    %s17 = ssub.s32 %s11, 2
    %s18 = sadd.s32 %s11, 1
    %s19 = ssub.s32 %s11, %s18
    %p20 = scmp.eq.s32.totalorder %s19, 0
    %s22 = sadd.s32 %s21, 1
    %s23 = scalar_select %p20, %s21, %s22
    %p26 = pneg %p20
    %p27 = scmp.eq.s32.totalorder %s11, 1
    %p28 = por %p26, %p27
    %p29 = scmp.ne.s32.totalorder %s21, %s24
    %p30 = scmp.eq.s32.totalorder %s11, 0
    %p31 = por %p29, %p30
    %p32 = scmp.ne.s32.totalorder %s21, %s24
    %p33 = scmp.eq.s32.totalorder %s16, 1
    %p34 = por %p32, %p33
    %p35 = scmp.ne.s32.totalorder %s24, %s25
    %p36 = scmp.eq.s32.totalorder %s16, 0
    %p37 = por %p35, %p36
    %p38 = scmp.ne.s32.totalorder %s24, %s25
    %p39 = scmp.eq.s32.totalorder %s17, 1
    %p40 = por %p38, %p39
    %p42 = scmp.ne.s32.totalorder %s25, %s41
    %p43 = scmp.eq.s32.totalorder %s17, 0
    %p44 = por %p42, %p43
    %s46 = sadd.s32 %s45, 1
    %p49 = scmp.eq.s32.totalorder %s11, 1
    %p50 = scmp.ne.s32.totalorder %s45, %s47
    %p51 = scmp.eq.s32.totalorder %s11, 0
    %p52 = por %p50, %p51
    %p53 = scmp.ne.s32.totalorder %s45, %s47
    %p54 = scmp.eq.s32.totalorder %s16, 1
    %p55 = por %p53, %p54
    %p56 = scmp.ne.s32.totalorder %s47, %s48
    %p57 = scmp.eq.s32.totalorder %s16, 0
    %p58 = por %p56, %p57
    %p59 = scmp.ne.s32.totalorder %s47, %s48
    %p60 = scmp.eq.s32.totalorder %s17, 1
    %p61 = por %p59, %p60
    %p63 = scmp.ne.s32.totalorder %s48, %s62
    %p64 = scmp.eq.s32.totalorder %s17, 0
    %p65 = por %p63, %p64
    %s67 = sadd.s32 %s66, 1
    %p70 = scmp.eq.s32.totalorder %s11, 1
    %p71 = scmp.ne.s32.totalorder %s66, %s68
    %p72 = scmp.eq.s32.totalorder %s11, 0
    %p73 = por %p71, %p72
    %p74 = scmp.ne.s32.totalorder %s66, %s68
    %p75 = scmp.eq.s32.totalorder %s16, 1
    %p76 = por %p74, %p75
    %p77 = scmp.ne.s32.totalorder %s68, %s69
    %p78 = scmp.eq.s32.totalorder %s16, 0
    %p79 = por %p77, %p78
    %p80 = scmp.ne.s32.totalorder %s68, %s69
    %p81 = scmp.eq.s32.totalorder %s17, 1
    %p82 = por %p80, %p81
    %p84 = scmp.ne.s32.totalorder %s69, %s83
    %p85 = scmp.eq.s32.totalorder %s17, 0
    %p86 = por %p84, %p85
    %s88 = sadd.s32 %s87, 1
    %p91 = scmp.eq.s32.totalorder %s11, 1
    %p92 = scmp.ne.s32.totalorder %s87, %s89
    %p93 = scmp.eq.s32.totalorder %s11, 0
    %p94 = por %p92, %p93
    %p95 = scmp.ne.s32.totalorder %s87, %s89
    %p96 = scmp.eq.s32.totalorder %s16, 1
    %p97 = por %p95, %p96
    %p98 = scmp.ne.s32.totalorder %s89, %s90
    %p99 = scmp.eq.s32.totalorder %s16, 0
    %p100 = por %p98, %p99
    %p101 = scmp.ne.s32.totalorder %s89, %s90
    %p102 = scmp.eq.s32.totalorder %s17, 1
    %p103 = por %p101, %p102
    %p105 = scmp.ne.s32.totalorder %s90, %s104
    %p106 = scmp.eq.s32.totalorder %s17, 0
    %p107 = por %p105, %p106
    %s109 = sadd.s32 %s108, 1
    %p112 = scmp.eq.s32.totalorder %s11, 1
    %p113 = scmp.ne.s32.totalorder %s108, %s110
    %p114 = scmp.eq.s32.totalorder %s11, 0
    %p115 = por %p113, %p114
    %p116 = scmp.ne.s32.totalorder %s108, %s110
    %p117 = scmp.eq.s32.totalorder %s16, 1
    %p118 = por %p116, %p117
    %p119 = scmp.ne.s32.totalorder %s110, %s111
    %p120 = scmp.eq.s32.totalorder %s16, 0
    %p121 = por %p119, %p120
    %p122 = scmp.ne.s32.totalorder %s110, %s111
    %p123 = scmp.eq.s32.totalorder %s17, 1
    %p124 = por %p122, %p123
    %p126 = scmp.ne.s32.totalorder %s111, %s125
    %p127 = scmp.eq.s32.totalorder %s17, 0
    %p128 = por %p126, %p127
    %s129 = ssub.s32 %s11, %s18
    %p130 = scmp.eq.s32.totalorder %s129, 0
    %s132 = sadd.s32 %s131, 1
    %s133 = scalar_select %p130, %s131, %s132
    %p136 = pneg %p130
    %p137 = scmp.eq.s32.totalorder %s11, 1
    %p138 = por %p136, %p137
    %p139 = scmp.ne.s32.totalorder %s131, %s134
    %p140 = scmp.eq.s32.totalorder %s11, 0
    %p141 = por %p139, %p140
    %p142 = scmp.ne.s32.totalorder %s131, %s134
    %p143 = scmp.eq.s32.totalorder %s16, 1
    %p144 = por %p142, %p143
    %p145 = scmp.ne.s32.totalorder %s134, %s135
    %p146 = scmp.eq.s32.totalorder %s16, 0
    %p147 = por %p145, %p146
    %p148 = scmp.ne.s32.totalorder %s134, %s135
    %p149 = scmp.eq.s32.totalorder %s17, 1
    %p150 = por %p148, %p149
    %p152 = scmp.ne.s32.totalorder %s135, %s151
    %p153 = scmp.eq.s32.totalorder %s17, 0
    %p154 = por %p152, %p153
    %p155 = scmp.le.s32.totalorder 1, %s11
    %p156 = scmp.lt.s32.totalorder %s11, 3
    %p157 = pnand %p155, %p156
    %p158 = pneg %p157
    // Predicated region
    $region9: #{_forward.1} parent=5 // pred_check
      _
    $region10: #{_forward.1} parent=5 // pred_check_branch
      %160 = sbr.rel (%p157) target = $region12
    $region11: #{_forward.1} parent=5 // pred_region
      %s161 = ssub.s32 %s11, 1
      // Predicated region
      $region13: #{_forward.1} parent=11 // pred_check
        %p162 = pneg %p58
      $region14: #{_forward.1} parent=11 // pred_check_branch
        %164 = sbr.rel (%p162) target = $region16
      $region15: #{_forward.1} parent=11 // pred_region
        _
      $region16: #{_forward.1} parent=11 // pred_fallthru
        _
      // Predicated region
      $region17: #{_forward.1} parent=11 // pred_check
        %p165 = pneg %p79
      $region18: #{_forward.1} parent=11 // pred_check_branch
        %167 = sbr.rel (%p165) target = $region20
      $region19: #{_forward.1} parent=11 // pred_region
        _
      $region20: #{_forward.1} parent=11 // pred_fallthru
        _
      // Predicated region
      $region21: #{_forward.1} parent=11 // pred_check
        %p168 = pneg %p100
      $region22: #{_forward.1} parent=11 // pred_check_branch
        %170 = sbr.rel (%p168) target = $region24
      $region23: #{_forward.1} parent=11 // pred_region
        _
      $region24: #{_forward.1} parent=11 // pred_fallthru
        _
      // Predicated region
      $region25: #{_forward.1} parent=11 // pred_check
        %p171 = pneg %p121
      $region26: #{_forward.1} parent=11 // pred_check_branch
        %173 = sbr.rel (%p171) target = $region28
      $region27: #{_forward.1} parent=11 // pred_region
        _
      $region28: #{_forward.1} parent=11 // pred_fallthru
        _
    $region12: #{_forward.1} parent=5 // pred_fallthru
      _
    %p174 = scmp.lt.s32.totalorder %s11, 2
    // Predicated region
    $region29: #{_forward.1} parent=5 // pred_check
      %p175 = pneg %p174
    $region30: #{_forward.1} parent=5 // pred_check_branch
      %177 = sbr.rel (%p175) target = $region32
    $region31: #{_forward.1} parent=5 // pred_region
      // Predicated region
      $region33: #{_forward.1} parent=31 // pred_check
        %p178 = pneg %p31
      $region34: #{_forward.1} parent=31 // pred_check_branch
        %180 = sbr.rel (%p178) target = $region36
      $region35: #{_forward.1} parent=31 // pred_region
        %p181 = scmp.lt.s32.totalorder %s11, 1
        %s182 = scalar_select %p181, %s11, 1
        %s183 = smul.addr %s182, 8
        %s184 = scalar_lea.vmem %s0, %s183
      $region36: #{_forward.1} parent=31 // pred_fallthru
        _
    $region32: #{_forward.1} parent=5 // pred_fallthru
      _
    %p185 = scmp.le.s32.totalorder 1, %s11
    %p186 = scmp.lt.s32.totalorder %s11, 3
    %p187 = pnand %p185, %p186
    %p188 = pneg %p187
    // Predicated region
    $region37: #{_forward.1} parent=5 // pred_check
      _
    $region38: #{_forward.1} parent=5 // pred_check_branch
      %190 = sbr.rel (%p187) target = $region40
    $region39: #{_forward.1} parent=5 // pred_region
      %s191 = ssub.s32 %s11, 1
      %p192 = scmp.lt.s32.totalorder %s16, 1
      %s193 = scalar_select %p192, %s16, 1
      %s194 = smul.addr %s193, 8
      %s195 = scalar_lea.vmem %s0, %s194
      %p196 = pneg %p37
      %p197 = pneg %p34
      %p198 = pneg %p58
      %p199 = pneg %p55
      %p200 = pneg %p79
      %p201 = pneg %p76
      %p202 = pneg %p100
      %p203 = pneg %p97
      %p204 = pneg %p121
      %p205 = pneg %p118
      %p206 = pneg %p147
      %p207 = pneg %p144
      %p208 = scmp.lt.s32.totalorder %s16, 1
      %s209 = scalar_select %p208, %s16, 1
      %s210 = smul.addr %s209, 8
      %s211 = scalar_lea.vmem %s5, %s210
      %p212 = scmp.lt.s32.totalorder %s16, 1
      %s213 = scalar_select %p212, %s16, 1
      %s214 = smul.addr %s213, 8
      %s215 = scalar_lea.vmem %s0, %s214
      %p216 = scmp.lt.s32.totalorder %s16, 1
      %s217 = scalar_select %p216, %s16, 1
      %s218 = smul.addr %s217, 8
      %s219 = scalar_lea.vmem %s5, %s218
      %v221 = vld [vmem:[%s215] sm:$0xff]
      %v222 = vpack.c.bf16 %v221, %v221
      %v223 = vld [vmem:[%s1] sm:$0xf]
      %v224 = vld [vmem:[%s1 + $0x4] sm:$0xf]
      %v225 = vld [vmem:[%s1 + $0x8] sm:$0xf]
      %v226 = vld [vmem:[%s1 + $0xc] sm:$0xf]
      %v227 = vld [vmem:[%s2] sm:$0x1]
      %v229 = vperm.slane %v227, 0
      %v235 = vunpack.c.l.b16 %v223
      %v236 = vunpack.c.l.b16 %v224
      %v237 = vunpack.c.l.b16 %v225
      %v238 = vunpack.c.l.b16 %v226
      %v239 = vpack.c.b16 %v236, %v235
      %v240 = vpack.c.b16 %v238, %v237
      %vm243 = vcmask 261120
      %v245 = vsel %vm243, %v222, 0
      %247 = vmatpush.bf16.msra.mxu0 0
      %248 = vmatpush.bf16.msra.mxu0 0
      %249 = vmatpush.bf16.msra.mxu0 0
      %250 = vmatpush.bf16.msra.mxu0 0
      %251 = vmatpush.bf16.msra.mxu0 0
      %252 = vmatpush.bf16.msra.mxu0 0
      %253 = vmatpush.bf16.msra.mxu0 %v240
      %254 = vmatpush.bf16.msra.mxu0 %v239
      %255 = vmatmul.bf16.gmra.mxu0 %v245
      %v256 = vpop.f32.mrf.mxu0
      %v257 = vadd.f32 %v229, %v256
      %v258 = vpop.f32.mrf.mxu0
      %259 = vdwg.mxu0
      %v260 = vmax.f32 %v257, 0.0
      %v261 = vpack.c.bf16 %v260, %v260
      %v262 = vld [vmem:[%s3] sm:$0xf]
      %v263 = vld [vmem:[%s3 + $0x4] sm:$0xf]
      %v264 = vld [vmem:[%s3 + $0x8] sm:$0xf]
      %v265 = vld [vmem:[%s3 + $0xc] sm:$0xf]
      %v266 = vld [vmem:[%s3 + $0x10] sm:$0xf]
      %v267 = vld [vmem:[%s3 + $0x14] sm:$0xf]
      %v268 = vld [vmem:[%s3 + $0x18] sm:$0xf]
      %v269 = vld [vmem:[%s3 + $0x1c] sm:$0xf]
      %v270 = vld [vmem:[%s3 + $0x20] sm:$0xf]
      %v271 = vld [vmem:[%s3 + $0x24] sm:$0xf]
      %v272 = vld [vmem:[%s3 + $0x28] sm:$0xf]
      %v273 = vld [vmem:[%s3 + $0x2c] sm:$0xf]
      %v274 = vld [vmem:[%s3 + $0x30] sm:$0xf]
      %v275 = vld [vmem:[%s3 + $0x34] sm:$0xf]
      %v276 = vld [vmem:[%s3 + $0x38] sm:$0xf]
      %v277 = vld [vmem:[%s3 + $0x3c] sm:$0xf]
      %v278 = vld [vmem:[%s4] sm:$0x1]
      %v280 = vperm.slane %v278, 0
      %v298 = vunpack.c.l.b16 %v262
      %v299 = vunpack.c.l.b16 %v263
      %v300 = vunpack.c.l.b16 %v264
      %v301 = vunpack.c.l.b16 %v265
      %v302 = vunpack.c.l.b16 %v266
      %v303 = vunpack.c.l.b16 %v267
      %v304 = vunpack.c.l.b16 %v268
      %v305 = vunpack.c.l.b16 %v269
      %v306 = vunpack.c.l.b16 %v270
      %v307 = vunpack.c.l.b16 %v271
      %v308 = vunpack.c.l.b16 %v272
      %v309 = vunpack.c.l.b16 %v273
      %v310 = vunpack.c.l.b16 %v274
      %v311 = vunpack.c.l.b16 %v275
      %v312 = vunpack.c.l.b16 %v276
      %v313 = vunpack.c.l.b16 %v277
      %v314 = vpack.c.b16 %v299, %v298
      %v315 = vpack.c.b16 %v301, %v300
      %v316 = vpack.c.b16 %v303, %v302
      %v317 = vpack.c.b16 %v305, %v304
      %v318 = vpack.c.b16 %v307, %v306
      %v319 = vpack.c.b16 %v309, %v308
      %v320 = vpack.c.b16 %v311, %v310
      %v321 = vpack.c.b16 %v313, %v312
      %330 = vmatpush.bf16.msra.mxu0 %v321
      %331 = vmatpush.bf16.msra.mxu0 %v320
      %332 = vmatpush.bf16.msra.mxu0 %v319
      %333 = vmatpush.bf16.msra.mxu0 %v318
      %334 = vmatpush.bf16.msra.mxu0 %v317
      %335 = vmatpush.bf16.msra.mxu0 %v316
      %336 = vmatpush.bf16.msra.mxu0 %v315
      %337 = vmatpush.bf16.msra.mxu0 %v314
      %338 = vmatmul.bf16.gmra.mxu0 %v261
      %v339 = vpop.f32.mrf.mxu0
      %v340 = vadd.f32 %v280, %v339
      %v341 = vpop.f32.mrf.mxu0
      %342 = vdwg.mxu0
      %vm343 = vcmask 244736
      %344 = vst.msk [vmem:[%s219] sm:$0xff] %vm343, %v340
      %p345 = scmp.lt.s32.totalorder %s16, 1
      %s346 = scalar_select %p345, %s16, 1
      %s347 = smul.addr %s346, 8
      %s348 = scalar_lea.vmem %s5, %s347
      // Predicated region
      $region41: #{_forward.1} parent=39 // pred_check
        %p349 = pneg %p144
      $region42: #{_forward.1} parent=39 // pred_check_branch
        %351 = sbr.rel (%p349) target = $region44
      $region43: #{_forward.1} parent=39 // pred_region
        _
      $region44: #{_forward.1} parent=39 // pred_fallthru
        _
    $region40: #{_forward.1} parent=5 // pred_fallthru
      _
    %p352 = scmp.le.s32.totalorder 2, %s11
    // Predicated region
    $region45: #{_forward.1} parent=5 // pred_check
      %p353 = pneg %p352
    $region46: #{_forward.1} parent=5 // pred_check_branch
      %355 = sbr.rel (%p353) target = $region48
    $region47: #{_forward.1} parent=5 // pred_region
      %s356 = ssub.s32 %s11, 2
      // Predicated region
      $region49: #{_forward.1} parent=47 // pred_check
        %p357 = pneg %p150
      $region50: #{_forward.1} parent=47 // pred_check_branch
        %359 = sbr.rel (%p357) target = $region52
      $region51: #{_forward.1} parent=47 // pred_region
        %p360 = scmp.lt.s32.totalorder %s17, 1
        %s361 = scalar_select %p360, %s17, 1
        %s362 = smul.addr %s361, 8
        %s363 = scalar_lea.vmem %s5, %s362
      $region52: #{_forward.1} parent=47 // pred_fallthru
        _
    $region48: #{_forward.1} parent=5 // pred_fallthru
      _
  $region6: #{_forward.1} parent=0 // loop_footer
    %s15 = sadd.s32 1, %s11
  $region7: #{_forward.1} parent=0 // loop_footer_branch
    %10 = sbr.rel target = $region3
  $region8: #{_forward.1} parent=0 // loop_exit
    _

</llo_original>
